<compile_context>
chip_gen: v7x
topology: tpu7x:2x2x1
jax: 0.10.0
libtpu: 0.0.40
codegen_flags: <defaults>
</compile_context>

<pallas_src>
import math

import jax
import jax.numpy as jnp
from jax import lax
from jax.experimental import pallas as pl
from jax.experimental.pallas import tpu as pltpu

BN_EPS = 1e-5


def _round_up(v, m):
    return (v + m - 1) // m * m


def _vmem_limit_bytes():
    """~75% of this generation's physical VMEM (96 MiB v5e/v6e, 48 MiB v7x)."""
    try:
        cap = int(pltpu.get_tpu_info().vmem_capacity_bytes)
    except Exception:
        cap = 64 * 1024 * 1024          # conservative fallback (fits v7x)
    return int(max(32 * 1024 * 1024, 0.75 * cap))


# ---------------- Pass 1: Linear1 + per-tile partial BN statistics -----------
def _make_linear1_stats_kernel(batch_true, batch_tile, d_h):
    """h = x@W1 + b1 (bf16 MXU, f32 acc); emit bf16 h and (8, d_h) partials."""
    need_mask = (batch_true % batch_tile) != 0
    groups = batch_tile // 8            # sublane groups per tile

    def kernel(x_ref, w1_ref, b1_ref, h_ref, sum_ref, sq_ref):
        # Linear1 on the MXU, f32 accumulation.
        h = jnp.dot(x_ref[...], w1_ref[...],
                    preferred_element_type=jnp.float32)
        h = h + b1_ref[...].astype(jnp.float32)
        # Store pre-BN activations in the (narrow) compute dtype — halves the
        # dominant HBM round-trip vs f32.  Stats below use the f32 value.
        h_ref[...] = h.astype(h_ref.dtype)

        # Mask zero-padded batch rows out of the statistics (last tile only).
        if need_mask:
            rows = pl.program_id(0) * batch_tile + lax.broadcasted_iota(
                jnp.int32, (batch_tile, 1), 0)
            hm = jnp.where(rows < batch_true, h, 0.0)
        else:
            hm = h

        # Per-tile partial sums, folded to one sublane group (8, d_h) so the
        # streamed partial outputs stay (8, 128)-aligned.  No resident
        # accumulator -> the batch axis can be "parallel" (megacore on v7x).
        hm3 = hm.reshape(groups, 8, d_h)
        sum_ref[...] = jnp.sum(hm3, axis=0)
        sq_ref[...] = jnp.sum(hm3 * hm3, axis=0)

    return kernel


# -------------------- Pass 2: BN apply + ReLU + Linear2 ----------------------
def _bn_relu_linear2_kernel(h_ref, scale_ref, shift_ref, w2_ref, b2_ref, o_ref):
    a = jnp.maximum(
        h_ref[...].astype(jnp.float32) * scale_ref[...] + shift_ref[...], 0.0)
    y = jnp.dot(a.astype(w2_ref.dtype), w2_ref[...],
                preferred_element_type=jnp.float32)
    o_ref[...] = (y + b2_ref[...].astype(jnp.float32)).astype(o_ref.dtype)


# ----------------------------------- Wrapper ---------------------------------
def mlp_head(x, w1, b1, gamma, beta, w2, b2, *,
             batch_tile=512, compute_dtype=jnp.bfloat16):
    """MLPHead forward.

    x:[B,in], w1:[in,hid], w2:[hid,out], b1/gamma/beta:[1,hid], b2:[1,out].
    compute_dtype: MXU operand / stored-h dtype (bf16 default; f32 accumulate).
    """
    B, in_dim = x.shape
    hidden = w1.shape[1]
    out_dim = w2.shape[1]

    # Lane alignment: feature dims -> multiples of 128 (lane-dense stores).
    d_in = _round_up(in_dim, 128)
    d_h = _round_up(hidden, 128)
    d_o = _round_up(out_dim, 128)

    # Balanced batch tiling: cap padding waste at one sublane group instead of
    # padding B up to a full batch_tile multiple.
    tb_cap = max(8, min(batch_tile, _round_up(B, 8)))
    nb = -(-B // tb_cap)                       # number of batch tiles
    tb = _round_up(-(-B // nb), 8)             # balanced, sublane-aligned tile
    b_pad = nb * tb

    def pad2(a, rows, cols, dt):
        return jnp.pad(a, ((0, rows - a.shape[0]),
                           (0, cols - a.shape[1]))).astype(dt)

    f32 = jnp.float32
    xp = pad2(x, b_pad, d_in, compute_dtype)
    w1p = pad2(w1, d_in, d_h, compute_dtype)      # bf16 weights: MXU peak +
    w2p = pad2(w2, d_h, d_o, compute_dtype)       #   halved weight residency
    b1p = pad2(b1, 1, d_h, f32)
    b2p = pad2(b2, 1, d_o, f32)
    gammap = pad2(gamma, 1, d_h, f32)
    betap = pad2(beta, 1, d_h, f32)

    sz_c = jnp.dtype(compute_dtype).itemsize
    vmem_limit = _vmem_limit_bytes()

    # ---------------- Pass 1: Linear1 + partial batch statistics -------------
    h, psum, psq = pl.pallas_call(
        _make_linear1_stats_kernel(B, tb, d_h),
        out_shape=(
            jax.ShapeDtypeStruct((b_pad, d_h), compute_dtype),  # pre-BN h
            jax.ShapeDtypeStruct((nb * 8, d_h), f32),           # partial sum
            jax.ShapeDtypeStruct((nb * 8, d_h), f32),           # partial sumsq
        ),
        grid_spec=pltpu.PrefetchScalarGridSpec(
            num_scalar_prefetch=0,
            grid=(nb,),
            in_specs=[
                pl.BlockSpec((tb, d_in), lambda i: (i, 0)),     # x: streamed
                pl.BlockSpec((d_in, d_h), lambda i: (0, 0)),    # W1: resident
                pl.BlockSpec((1, d_h), lambda i: (0, 0)),       # b1
            ],
            out_specs=[
                pl.BlockSpec((tb, d_h), lambda i: (i, 0)),      # h: streamed
                pl.BlockSpec((8, d_h), lambda i: (i, 0)),       # partial sum
                pl.BlockSpec((8, d_h), lambda i: (i, 0)),       # partial sumsq
            ],
        ),
        compiler_params=pltpu.CompilerParams(
            dimension_semantics=("parallel",),   # no resident accumulator
            vmem_limit_bytes=vmem_limit,
        ),
        cost_estimate=pl.CostEstimate(
            flops=2 * b_pad * d_in * d_h,
            transcendentals=0,
            bytes_accessed=int(b_pad * d_in * sz_c + d_in * d_h * sz_c
                               + d_h * 4 + b_pad * d_h * sz_c
                               + 2 * nb * 8 * d_h * 4),
        ),
    )(xp, w1p, b1p)

    # Tiny finalize in plain JAX: fold partials -> fused BN scale / shift rows.
    bsum = jnp.sum(psum, axis=0, keepdims=True)
    bsq = jnp.sum(psq, axis=0, keepdims=True)
    mean = bsum / B
    var = jnp.maximum(bsq / B - mean * mean, 0.0)
    scale = lax.rsqrt(var + BN_EPS) * gammap
    shift = betap - mean * scale

    # ---------------- Pass 2: BN apply + ReLU + Linear2 ----------------------
    y = pl.pallas_call(
        _bn_relu_linear2_kernel,
        out_shape=jax.ShapeDtypeStruct((b_pad, d_o), x.dtype),
        grid_spec=pltpu.PrefetchScalarGridSpec(
            num_scalar_prefetch=0,
            grid=(nb,),
            in_specs=[
                pl.BlockSpec((tb, d_h), lambda i: (i, 0)),      # h: streamed
                pl.BlockSpec((1, d_h), lambda i: (0, 0)),       # scale
                pl.BlockSpec((1, d_h), lambda i: (0, 0)),       # shift
                pl.BlockSpec((d_h, d_o), lambda i: (0, 0)),     # W2: resident
                pl.BlockSpec((1, d_o), lambda i: (0, 0)),       # b2
            ],
            out_specs=pl.BlockSpec((tb, d_o), lambda i: (i, 0)),
        ),
        compiler_params=pltpu.CompilerParams(
            dimension_semantics=("parallel",),
            vmem_limit_bytes=vmem_limit,
        ),
        cost_estimate=pl.CostEstimate(
            flops=2 * b_pad * d_h * d_o,
            transcendentals=0,
            bytes_accessed=int(b_pad * d_h * sz_c + d_h * d_o * sz_c
                               + 2 * d_h * 4 + d_o * 4
                               + b_pad * d_o * jnp.dtype(x.dtype).itemsize),
        ),
    )(h, scale, shift, w2p, b2p)

    # Strip batch / lane padding.
    return y[:B, :out_dim]


# ------------------------------ Init & reference ------------------------------
def init_params(key, in_dim, hidden_dim, out_dim, dtype=jnp.float32):
    """Deterministic init mimicking PyTorch nn.Linear / BatchNorm1d defaults."""
    k1, k2, k3, k4 = jax.random.split(key, 4)
    bound1 = 1.0 / math.sqrt(in_dim)
    w1 = jax.random.uniform(k1, (in_dim, hidden_dim), dtype, -bound1, bound1)
    b1 = jax.random.uniform(k2, (1, hidden_dim), dtype, -bound1, bound1)
    gamma = jnp.ones((1, hidden_dim), dtype)
    beta = jnp.zeros((1, hidden_dim), dtype)
    bound2 = 1.0 / math.sqrt(hidden_dim)
    w2 = jax.random.uniform(k3, (hidden_dim, out_dim), dtype, -bound2, bound2)
    b2 = jax.random.uniform(k4, (1, out_dim), dtype, -bound2, bound2)
    return w1, b1, gamma, beta, w2, b2


def mlp_head_ref(x, w1, b1, gamma, beta, w2, b2):
    """Pure-JAX f32 reference (PyTorch training-mode BN semantics)."""
    h = x @ w1 + b1
    mean = jnp.mean(h, axis=0, keepdims=True)
    var = jnp.mean((h - mean) ** 2, axis=0, keepdims=True)
    h = (h - mean) / jnp.sqrt(var + BN_EPS) * gamma + beta
    h = jnp.maximum(h, 0.0)
    return h @ w2 + b2


if __name__ == "__main__":
    # Small shapes consistent with MLPHead (in -> hidden -> out), deliberately
    # unaligned so the test exercises feature padding, a multi-step batch grid
    # (B=20 with tile 8 -> 3 grid steps) and padded-row masking of BN stats.
    B, in_dim, hidden_dim, out_dim = 20, 48, 96, 24

    key = jax.random.PRNGKey(0)
    kx, kp = jax.random.split(key)
    x = jax.random.normal(kx, (B, in_dim), jnp.float32)
    params = init_params(kp, in_dim, hidden_dim, out_dim)
    y_ref = mlp_head_ref(x, *params)

    # Default (bf16 MXU operands, f32 accumulation) — bf16-level tolerance.
    y = mlp_head(x, *params, batch_tile=8)
    jax.block_until_ready(y)
    assert y.shape == (B, out_dim)
    err_bf16 = float(jnp.max(jnp.abs(y.astype(jnp.float32) - y_ref)))
    assert jnp.allclose(y.astype(jnp.float32), y_ref,
                        atol=7e-2, rtol=5e-2), err_bf16

    # f32 compute path — tight check of the exact forward semantics.
    y32 = mlp_head(x, *params, batch_tile=8, compute_dtype=jnp.float32)
    jax.block_until_ready(y32)
    err_f32 = float(jnp.max(jnp.abs(y32 - y_ref)))
    assert jnp.allclose(y32, y_ref, atol=2e-4, rtol=2e-4), err_f32

    print("KERNEL_OK")
</pallas_src>

<mosaic_0001>
module attributes {stable_mosaic.version = 11 : i64} {
  func.func @kernel(%arg0: i32, %arg1: memref<8x128xbf16, #tpu.memory_space<vmem>>, %arg2: memref<128x128xbf16, #tpu.memory_space<vmem>>, %arg3: memref<1x128xf32, #tpu.memory_space<vmem>>, %arg4: memref<8x128xbf16, #tpu.memory_space<vmem>>, %arg5: memref<8x128xf32, #tpu.memory_space<vmem>>, %arg6: memref<8x128xf32, #tpu.memory_space<vmem>>) attributes {dimension_semantics = [#tpu.dimension_semantics<parallel>], iteration_bounds = array<i64: 3>, scalar_prefetch = 0 : i64, scratch_operands = 0 : i64, tpu.core_type = #tpu.core_type<tc>, window_params = [{transform_indices = @transform_0, window_bounds = array<i64: 8, 128>}, {pipeline_mode = #tpu.pipeline_mode<synchronous>, transform_indices = @transform_1, window_bounds = array<i64: 128, 128>}, {pipeline_mode = #tpu.pipeline_mode<synchronous>, transform_indices = @transform_2, window_bounds = array<i64: 1, 128>}, {transform_indices = @transform_3, window_bounds = array<i64: 8, 128>}, {transform_indices = @transform_4, window_bounds = array<i64: 8, 128>}, {transform_indices = @transform_5, window_bounds = array<i64: 8, 128>}]} {
    %c0 = arith.constant 0 : index
    %c0_0 = arith.constant 0 : index
    %0 = vector.load %arg1[%c0, %c0_0] : memref<8x128xbf16, #tpu.memory_space<vmem>>, vector<8x128xbf16>
    %c0_1 = arith.constant 0 : index
    %c0_2 = arith.constant 0 : index
    %1 = vector.load %arg2[%c0_1, %c0_2] : memref<128x128xbf16, #tpu.memory_space<vmem>>, vector<128x128xbf16>
    %cst = arith.constant dense<0.000000e+00> : vector<8x128xf32>
    %2 = tpu.matmul %0, %1, %cst {dimension_numbers = #tpu.dot_dimension_numbers<[1], [0], [0], [1], [0, 0, 1, 1], [], []>} : vector<8x128xbf16>, vector<128x128xbf16>, vector<8x128xf32> -> vector<8x128xf32>
    %c0_3 = arith.constant 0 : index
    %c0_4 = arith.constant 0 : index
    %3 = vector.load %arg3[%c0_3, %c0_4] : memref<1x128xf32, #tpu.memory_space<vmem>>, vector<1x128xf32>
    %4 = vector.broadcast %3 : vector<1x128xf32> to vector<8x128xf32>
    %5 = arith.addf %2, %4 : vector<8x128xf32>
    %6 = arith.truncf %5 : vector<8x128xf32> to vector<8x128xbf16>
    %c0_5 = arith.constant 0 : index
    %c0_6 = arith.constant 0 : index
    %7 = vector.load %arg4[%c0_5, %c0_6] : memref<8x128xbf16, #tpu.memory_space<vmem>>, vector<8x128xbf16>
    tpu.vector_store %arg4[%c0_5, %c0_6], %6 {strides = array<i32>} : memref<8x128xbf16, #tpu.memory_space<vmem>>, vector<8x128xbf16>,
    %c8_i32 = arith.constant 8 : i32
    %8 = arith.muli %arg0, %c8_i32 : i32
    %9 = tpu.iota {dimensions = array<i32: 0>} : vector<8x1xi32>
    %10 = vector.broadcast %8 : i32 to vector<8x1xi32>
    %11 = arith.addi %10, %9 : vector<8x1xi32>
    %c20_i32 = arith.constant 20 : i32
    %12 = vector.broadcast %c20_i32 : i32 to vector<8x1xi32>
    %13 = arith.cmpi slt, %11, %12 : vector<8x1xi32>
    %cst_7 = arith.constant 0.000000e+00 : f32
    %14 = vector.shape_cast %13 : vector<8x1xi1> to vector<8x1xi1>
    %15 = vector.broadcast %14 : vector<8x1xi1> to vector<8x128xi1>
    %16 = vector.broadcast %cst_7 : f32 to vector<8x128xf32>
    %17 = arith.select %15, %5, %16 : vector<8x128xi1>, vector<8x128xf32>
    %18 = vector.shape_cast %17 : vector<8x128xf32> to vector<1x8x128xf32>
    %cst_8 = arith.constant dense<0.000000e+00> : vector<8x128xf32>
    %19 = vector.multi_reduction <add>, %18, %cst_8 [0] : vector<1x8x128xf32> to vector<8x128xf32>
    %c0_9 = arith.constant 0 : index
    %c0_10 = arith.constant 0 : index
    %20 = vector.load %arg5[%c0_9, %c0_10] : memref<8x128xf32, #tpu.memory_space<vmem>>, vector<8x128xf32>
    tpu.vector_store %arg5[%c0_9, %c0_10], %19 {strides = array<i32>} : memref<8x128xf32, #tpu.memory_space<vmem>>, vector<8x128xf32>,
    %21 = arith.mulf %18, %18 : vector<1x8x128xf32>
    %cst_11 = arith.constant dense<0.000000e+00> : vector<8x128xf32>
    %22 = vector.multi_reduction <add>, %21, %cst_11 [0] : vector<1x8x128xf32> to vector<8x128xf32>
    %c0_12 = arith.constant 0 : index
    %c0_13 = arith.constant 0 : index
    %23 = vector.load %arg6[%c0_12, %c0_13] : memref<8x128xf32, #tpu.memory_space<vmem>>, vector<8x128xf32>
    tpu.vector_store %arg6[%c0_12, %c0_13], %22 {strides = array<i32>} : memref<8x128xf32, #tpu.memory_space<vmem>>, vector<8x128xf32>,
    return
  }
  func.func @transform_0(%arg0: i32) -> (i32, i32) {
    %c0_i32 = arith.constant 0 : i32
    %c0_i32_0 = arith.constant 0 : i32
    return %arg0, %c0_i32 : i32, i32
  }
  func.func @transform_1(%arg0: i32) -> (i32, i32) {
    %c0_i32 = arith.constant 0 : i32
    %c0_i32_0 = arith.constant 0 : i32
    %c0_i32_1 = arith.constant 0 : i32
    return %c0_i32, %c0_i32_0 : i32, i32
  }
  func.func @transform_2(%arg0: i32) -> (i32, i32) {
    %c0_i32 = arith.constant 0 : i32
    %c0_i32_0 = arith.constant 0 : i32
    %c0_i32_1 = arith.constant 0 : i32
    return %c0_i32, %c0_i32_0 : i32, i32
  }
  func.func @transform_3(%arg0: i32) -> (i32, i32) {
    %c0_i32 = arith.constant 0 : i32
    %c0_i32_0 = arith.constant 0 : i32
    return %arg0, %c0_i32 : i32, i32
  }
  func.func @transform_4(%arg0: i32) -> (i32, i32) {
    %c0_i32 = arith.constant 0 : i32
    %c0_i32_0 = arith.constant 0 : i32
    return %arg0, %c0_i32 : i32, i32
  }
  func.func @transform_5(%arg0: i32) -> (i32, i32) {
    %c0_i32 = arith.constant 0 : i32
    %c0_i32_0 = arith.constant 0 : i32
    return %arg0, %c0_i32 : i32, i32
  }
}

</mosaic_0001>

<llo_original>
// kernel: tpu_custom_call.1
$region0: #{tpu_custom_call.1}
  #allocation0 [shape = 'u32[]', space=smem, size = 0x4, offset = 0x4, fixed_abs, tag = 'smem constant byte address 0x4 - core index']
  #allocation1 [shape = 'u32[144,128]{1,0:T(1,128)}', space=vmem, size = 0x12000, scoped, tag = 'internal scratch']
  %s0 = inlined_call_operand.hbm [shape: bf16[24,128], index: 0, kind: input, shape index: {}]
  %s1 = inlined_call_operand.hbm [shape: bf16[128,128], index: 1, kind: input, shape index: {}]
  %s2 = inlined_call_operand.vmem [shape: f32[1,128], index: 2, kind: input, shape index: {}]
  %s3 = inlined_call_operand.hbm [shape: bf16[24,128], index: 3, kind: output, shape index: {0}]
  %s4 = inlined_call_operand.hbm [shape: f32[24,128], index: 4, kind: output, shape index: {1}]
  %s5 = inlined_call_operand.hbm [shape: f32[24,128], index: 5, kind: output, shape index: {2}]
  %6 = xla_tuple %s3, %s4, %s5
  %s7 = sld [smem:[#allocation0]]
  $region69: #{tpu_custom_call.1} parent=0
    _
  %s9 = ssub.s32 1, %s7
  %s10 = scalar_select 0, %s9, %s7
  $region1: #{tpu_custom_call.1} parent=0
    #allocation2 [shape = 'u8[4096]{0}', space=vmem, size = 0x1000, scoped, tag = 'input window, operand 0']
    #allocation3 [shape = 's32[2]{0}', space=sflag, size = 0x8, scoped, tag = 'scoped memory for tpu_custom_call.1']
    #allocation4 [shape = 's32[2]{0}', space=sflag, size = 0x8, scoped, tag = 'scoped memory for tpu_custom_call.1']
    #allocation5 [shape = 'u8[32768]{0}', space=vmem, size = 0x8000, scoped, tag = 'input window, operand 1, single buffered']
    #allocation6 [shape = 's32[1]{0}', space=sflag, size = 0x4, scoped, tag = 'scoped memory for tpu_custom_call.1']
    #allocation7 [shape = 'u8[4096]{0}', space=vmem, size = 0x1000, scoped, tag = 'output window, operand 0']
    #allocation8 [shape = 'u8[8192]{0}', space=vmem, size = 0x2000, scoped, tag = 'output window, operand 1']
    #allocation9 [shape = 's32[2]{0}', space=sflag, size = 0x8, scoped, tag = 'scoped memory for tpu_custom_call.1']
    #allocation10 [shape = 'u8[8192]{0}', space=vmem, size = 0x2000, scoped, tag = 'output window, operand 2']
    %11 = vsyncpa [#allocation3], 0
    %s12 = scalar_lea.sflag [#allocation3], 1
    %13 = vsyncpa %s12, 0
    %14 = vsyncpa [#allocation6], 0
    %15 = vsyncpa [#allocation4], 0
    %s16 = scalar_lea.sflag [#allocation4], 1
    %17 = vsyncpa %s16, 0
    %18 = vsyncpa [#allocation9], 0
    %s19 = scalar_lea.sflag [#allocation9], 1
    %20 = vsyncpa %s19, 0
    loop: start=0, step=1, limit=5
    $region2: #{tpu_custom_call.1} parent=1 // loop_pre_header
      _
    $region3: #{tpu_custom_call.1} parent=1 // loop_header
      %s22 = sphi 0, %s26
      %p23 = scmp.ge.s32.totalorder %s22, 5
      %s32 = sphi 0, %s34
      %s35 = sphi 0, %s32
      %s36 = sphi 0, %s35
      %s52 = sphi 0, %s36
      %s56 = sphi 0, %s56
      %s58 = sphi 0, %s56
      %s59 = sphi 0, %s58
      %s73 = sphi 0, %s59
      %s77 = sphi 0, %s77
      %s79 = sphi 0, %s77
      %s80 = sphi 0, %s79
      %s94 = sphi 0, %s80
      %s100 = sphi 0, %s102
      %s103 = sphi 0, %s100
      %s104 = sphi 0, %s103
      %s120 = sphi 0, %s104
      %s126 = sphi 0, %s128
      %s129 = sphi 0, %s126
      %s130 = sphi 0, %s129
      %s146 = sphi 0, %s130
      %s152 = sphi 0, %s154
      %s155 = sphi 0, %s152
      %s156 = sphi 0, %s155
      %s172 = sphi 0, %s156
    $region4: #{tpu_custom_call.1} parent=1 // loop_header_branch
      %25 = sbr.rel (%p23) target = $region8
    $region5: #{tpu_custom_call.1} parent=1 // loop_body
      %s27 = ssub.s32 %s22, 1
      %s28 = ssub.s32 %s22, 2
      %s29 = sadd.s32 %s22, 1
      %s30 = ssub.s32 %s22, %s29
      %p31 = scmp.eq.s32.totalorder %s30, 0
      %s33 = sadd.s32 %s32, 1
      %s34 = scalar_select %p31, %s32, %s33
      %p37 = pneg %p31
      %p38 = scmp.eq.s32.totalorder %s22, 2
      %p39 = por %p37, %p38
      %p40 = scmp.ne.s32.totalorder %s32, %s35
      %p41 = scmp.eq.s32.totalorder %s22, 0
      %p42 = por %p40, %p41
      %p43 = scmp.ne.s32.totalorder %s32, %s35
      %p44 = scmp.eq.s32.totalorder %s27, 2
      %p45 = por %p43, %p44
      %p46 = scmp.ne.s32.totalorder %s35, %s36
      %p47 = scmp.eq.s32.totalorder %s27, 0
      %p48 = por %p46, %p47
      %p49 = scmp.ne.s32.totalorder %s35, %s36
      %p50 = scmp.eq.s32.totalorder %s28, 2
      %p51 = por %p49, %p50
      %p53 = scmp.ne.s32.totalorder %s36, %s52
      %p54 = scmp.eq.s32.totalorder %s28, 0
      %p55 = por %p53, %p54
      %s57 = sadd.s32 %s56, 1
      %p60 = scmp.eq.s32.totalorder %s22, 2
      %p61 = scmp.ne.s32.totalorder %s56, %s58
      %p62 = scmp.eq.s32.totalorder %s22, 0
      %p63 = por %p61, %p62
      %p64 = scmp.ne.s32.totalorder %s56, %s58
      %p65 = scmp.eq.s32.totalorder %s27, 2
      %p66 = por %p64, %p65
      %p67 = scmp.ne.s32.totalorder %s58, %s59
      %p68 = scmp.eq.s32.totalorder %s27, 0
      %p69 = por %p67, %p68
      %p70 = scmp.ne.s32.totalorder %s58, %s59
      %p71 = scmp.eq.s32.totalorder %s28, 2
      %p72 = por %p70, %p71
      %p74 = scmp.ne.s32.totalorder %s59, %s73
      %p75 = scmp.eq.s32.totalorder %s28, 0
      %p76 = por %p74, %p75
      %s78 = sadd.s32 %s77, 1
      %p81 = scmp.eq.s32.totalorder %s22, 2
      %p82 = scmp.ne.s32.totalorder %s77, %s79
      %p83 = scmp.eq.s32.totalorder %s22, 0
      %p84 = por %p82, %p83
      %p85 = scmp.ne.s32.totalorder %s77, %s79
      %p86 = scmp.eq.s32.totalorder %s27, 2
      %p87 = por %p85, %p86
      %p88 = scmp.ne.s32.totalorder %s79, %s80
      %p89 = scmp.eq.s32.totalorder %s27, 0
      %p90 = por %p88, %p89
      %p91 = scmp.ne.s32.totalorder %s79, %s80
      %p92 = scmp.eq.s32.totalorder %s28, 2
      %p93 = por %p91, %p92
      %p95 = scmp.ne.s32.totalorder %s80, %s94
      %p96 = scmp.eq.s32.totalorder %s28, 0
      %p97 = por %p95, %p96
      %s98 = ssub.s32 %s22, %s29
      %p99 = scmp.eq.s32.totalorder %s98, 0
      %s101 = sadd.s32 %s100, 1
      %s102 = scalar_select %p99, %s100, %s101
      %p105 = pneg %p99
      %p106 = scmp.eq.s32.totalorder %s22, 2
      %p107 = por %p105, %p106
      %p108 = scmp.ne.s32.totalorder %s100, %s103
      %p109 = scmp.eq.s32.totalorder %s22, 0
      %p110 = por %p108, %p109
      %p111 = scmp.ne.s32.totalorder %s100, %s103
      %p112 = scmp.eq.s32.totalorder %s27, 2
      %p113 = por %p111, %p112
      %p114 = scmp.ne.s32.totalorder %s103, %s104
      %p115 = scmp.eq.s32.totalorder %s27, 0
      %p116 = por %p114, %p115
      %p117 = scmp.ne.s32.totalorder %s103, %s104
      %p118 = scmp.eq.s32.totalorder %s28, 2
      %p119 = por %p117, %p118
      %p121 = scmp.ne.s32.totalorder %s104, %s120
      %p122 = scmp.eq.s32.totalorder %s28, 0
      %p123 = por %p121, %p122
      %s124 = ssub.s32 %s22, %s29
      %p125 = scmp.eq.s32.totalorder %s124, 0
      %s127 = sadd.s32 %s126, 1
      %s128 = scalar_select %p125, %s126, %s127
      %p131 = pneg %p125
      %p132 = scmp.eq.s32.totalorder %s22, 2
      %p133 = por %p131, %p132
      %p134 = scmp.ne.s32.totalorder %s126, %s129
      %p135 = scmp.eq.s32.totalorder %s22, 0
      %p136 = por %p134, %p135
      %p137 = scmp.ne.s32.totalorder %s126, %s129
      %p138 = scmp.eq.s32.totalorder %s27, 2
      %p139 = por %p137, %p138
      %p140 = scmp.ne.s32.totalorder %s129, %s130
      %p141 = scmp.eq.s32.totalorder %s27, 0
      %p142 = por %p140, %p141
      %p143 = scmp.ne.s32.totalorder %s129, %s130
      %p144 = scmp.eq.s32.totalorder %s28, 2
      %p145 = por %p143, %p144
      %p147 = scmp.ne.s32.totalorder %s130, %s146
      %p148 = scmp.eq.s32.totalorder %s28, 0
      %p149 = por %p147, %p148
      %s150 = ssub.s32 %s22, %s29
      %p151 = scmp.eq.s32.totalorder %s150, 0
      %s153 = sadd.s32 %s152, 1
      %s154 = scalar_select %p151, %s152, %s153
      %p157 = pneg %p151
      %p158 = scmp.eq.s32.totalorder %s22, 2
      %p159 = por %p157, %p158
      %p160 = scmp.ne.s32.totalorder %s152, %s155
      %p161 = scmp.eq.s32.totalorder %s22, 0
      %p162 = por %p160, %p161
      %p163 = scmp.ne.s32.totalorder %s152, %s155
      %p164 = scmp.eq.s32.totalorder %s27, 2
      %p165 = por %p163, %p164
      %p166 = scmp.ne.s32.totalorder %s155, %s156
      %p167 = scmp.eq.s32.totalorder %s27, 0
      %p168 = por %p166, %p167
      %p169 = scmp.ne.s32.totalorder %s155, %s156
      %p170 = scmp.eq.s32.totalorder %s28, 2
      %p171 = por %p169, %p170
      %p173 = scmp.ne.s32.totalorder %s156, %s172
      %p174 = scmp.eq.s32.totalorder %s28, 0
      %p175 = por %p173, %p174
      %p176 = scmp.le.s32.totalorder 1, %s22
      %p177 = scmp.lt.s32.totalorder %s22, 4
      %p178 = pnand %p176, %p177
      %p179 = pneg %p178
      // Predicated region
      $region9: #{tpu_custom_call.1} parent=5 // pred_check
        _
      $region10: #{tpu_custom_call.1} parent=5 // pred_check_branch
        %181 = sbr.rel (%p178) target = $region12
      $region11: #{tpu_custom_call.1} parent=5 // pred_region
        %s182 = ssub.s32 %s22, 1
        // Predicated region
        $region13: #{tpu_custom_call.1} parent=11 // pred_check
          %p183 = pneg %p69
        $region14: #{tpu_custom_call.1} parent=11 // pred_check_branch
          %185 = sbr.rel (%p183) target = $region16
        $region15: #{tpu_custom_call.1} parent=11 // pred_region
          %s187 = ssub.s32 1024, 1024
          %188 = vsyncadd [#allocation6], %s187
          %s189 = sshll.u32 [#allocation5], 4
          %s190 = int_to_ptr.vmem [resolvable:$true] %s189
          %195 = dma.hbm_to_vmem [thread:$0]  %s1, 1024, %s190, [#allocation6], 64, 64, 4
        $region16: #{tpu_custom_call.1} parent=11 // pred_fallthru
          _
        // Predicated region
        $region17: #{tpu_custom_call.1} parent=11 // pred_check
          %p196 = pneg %p90
        $region18: #{tpu_custom_call.1} parent=11 // pred_check_branch
          %198 = sbr.rel (%p196) target = $region20
        $region19: #{tpu_custom_call.1} parent=11 // pred_region
          _
        $region20: #{tpu_custom_call.1} parent=11 // pred_fallthru
          _
      $region12: #{tpu_custom_call.1} parent=5 // pred_fallthru
        _
      %p199 = scmp.lt.s32.totalorder %s22, 3
      // Predicated region
      $region21: #{tpu_custom_call.1} parent=5 // pred_check
        %p200 = pneg %p199
      $region22: #{tpu_custom_call.1} parent=5 // pred_check_branch
        %202 = sbr.rel (%p200) target = $region24
      $region23: #{tpu_custom_call.1} parent=5 // pred_region
        // Predicated region
        $region25: #{tpu_custom_call.1} parent=23 // pred_check
          %p203 = pneg %p42
        $region26: #{tpu_custom_call.1} parent=23 // pred_check_branch
          %205 = sbr.rel (%p203) target = $region28
        $region27: #{tpu_custom_call.1} parent=23 // pred_region
          %s206 = sand.u32 %s32, 1
          %s207 = scalar_lea.sflag [#allocation3], %s206
          %s208 = sand.u32 %s32, 1
          %s209 = smul.addr %s208, 4
          %s210 = scalar_lea.vmem [#allocation2], %s209
          %s212 = ssub.s32 64, 64
          %213 = vsyncadd %s207, %s212
          %s214 = smul.addr %s22, 64
          %s215 = scalar_lea.hbm %s0, %s214
          %s217 = sshll.u32 %s210, 4
          %s218 = int_to_ptr.vmem [resolvable:$true] %s217
          %220 = dma.hbm_to_vmem [thread:$0]  %s215, 64, %s218, %s207
        $region28: #{tpu_custom_call.1} parent=23 // pred_fallthru
          _
      $region24: #{tpu_custom_call.1} parent=5 // pred_fallthru
        _
      %p221 = scmp.le.s32.totalorder 1, %s22
      %p222 = scmp.lt.s32.totalorder %s22, 4
      %p223 = pnand %p221, %p222
      %p224 = pneg %p223
      // Predicated region
      $region29: #{tpu_custom_call.1} parent=5 // pred_check
        _
      $region30: #{tpu_custom_call.1} parent=5 // pred_check_branch
        %226 = sbr.rel (%p223) target = $region32
      $region31: #{tpu_custom_call.1} parent=5 // pred_region
        %s227 = ssub.s32 %s22, 1
        %s228 = sand.u32 %s35, 1
        %s229 = scalar_lea.sflag [#allocation3], %s228
        %s230 = sand.u32 %s35, 1
        %s231 = smul.addr %s230, 4
        %s232 = scalar_lea.vmem [#allocation2], %s231
        // Predicated region
        $region33: #{tpu_custom_call.1} parent=31 // pred_check
          %p233 = pneg %p48
        $region34: #{tpu_custom_call.1} parent=31 // pred_check_branch
          %235 = sbr.rel (%p233) target = $region36
        $region35: #{tpu_custom_call.1} parent=31 // pred_region
          %236 = dma.done %s229, 64
        $region36: #{tpu_custom_call.1} parent=31 // pred_fallthru
          _
        // Predicated region
        $region37: #{tpu_custom_call.1} parent=31 // pred_check
          %p237 = pneg %p69
        $region38: #{tpu_custom_call.1} parent=31 // pred_check_branch
          %239 = sbr.rel (%p237) target = $region40
        $region39: #{tpu_custom_call.1} parent=31 // pred_region
          %240 = dma.done [#allocation6], 1024
        $region40: #{tpu_custom_call.1} parent=31 // pred_fallthru
          _
        %s241 = sand.u32 %s35, 1
        %s242 = scalar_lea.sflag [#allocation3], %s241
        %s243 = sand.u32 %s35, 1
        %s244 = smul.addr %s243, 4
        %s245 = scalar_lea.vmem [#allocation2], %s244
        %p246 = pneg %p48
        %p247 = pneg %p45
        %p248 = pneg %p69
        %p249 = pneg %p66
        %p250 = pneg %p90
        %p251 = pneg %p87
        %p252 = pneg %p116
        %p253 = pneg %p113
        %s254 = sand.u32 %s103, 1
        %s255 = scalar_lea.sflag [#allocation4], %s254
        %s256 = sand.u32 %s103, 1
        %s257 = smul.addr %s256, 4
        %s258 = scalar_lea.vmem [#allocation7], %s257
        %p259 = pneg %p142
        %p260 = pneg %p139
        %s261 = sand.u32 %s27, 1
        %s262 = scalar_lea.sflag [#allocation9], %s261
        %s263 = sand.u32 %s129, 1
        %s264 = smul.addr %s263, 8
        %s265 = scalar_lea.vmem [#allocation8], %s264
        %p266 = pneg %p168
        %p267 = pneg %p165
        %s268 = sand.u32 %s27, 1
        %s269 = scalar_lea.sflag [#allocation9], %s268
        %s270 = sand.u32 %s155, 1
        %s271 = smul.addr %s270, 8
        %s272 = scalar_lea.vmem [#allocation10], %s271
        %v274 = vld [vmem:[%s232] sm:$0xf]
        %v275 = vld [vmem:[#allocation5] sm:$0xf]
        %v276 = vld [vmem:[#allocation5 + $0x4] sm:$0xf]
        %v277 = vld [vmem:[#allocation5 + $0x8] sm:$0xf]
        %v278 = vld [vmem:[#allocation5 + $0xc] sm:$0xf]
        %v279 = vld [vmem:[#allocation5 + $0x10] sm:$0xf]
        %v280 = vld [vmem:[#allocation5 + $0x14] sm:$0xf]
        %v281 = vld [vmem:[#allocation5 + $0x18] sm:$0xf]
        %v282 = vld [vmem:[#allocation5 + $0x1c] sm:$0xf]
        %v283 = vld [vmem:[#allocation5 + $0x20] sm:$0xf]
        %v284 = vld [vmem:[#allocation5 + $0x24] sm:$0xf]
        %v285 = vld [vmem:[#allocation5 + $0x28] sm:$0xf]
        %v286 = vld [vmem:[#allocation5 + $0x2c] sm:$0xf]
        %v287 = vld [vmem:[#allocation5 + $0x30] sm:$0xf]
        %v288 = vld [vmem:[#allocation5 + $0x34] sm:$0xf]
        %v289 = vld [vmem:[#allocation5 + $0x38] sm:$0xf]
        %v290 = vld [vmem:[#allocation5 + $0x3c] sm:$0xf]
        %v291 = vld [vmem:[%s2] sm:$0x1]
        %v293 = vlaneseq
        %v294 = vshrl.u32 %v293, 7
        %v295 = vsub.s32 0, %v294
        %v296 = vrot.slane %v291, %v295
        %v314 = vunpack.c.l.b16 %v275
        %v315 = vunpack.c.l.b16 %v276
        %v316 = vunpack.c.l.b16 %v277
        %v317 = vunpack.c.l.b16 %v278
        %v318 = vunpack.c.l.b16 %v279
        %v319 = vunpack.c.l.b16 %v280
        %v320 = vunpack.c.l.b16 %v281
        %v321 = vunpack.c.l.b16 %v282
        %v322 = vunpack.c.l.b16 %v283
        %v323 = vunpack.c.l.b16 %v284
        %v324 = vunpack.c.l.b16 %v285
        %v325 = vunpack.c.l.b16 %v286
        %v326 = vunpack.c.l.b16 %v287
        %v327 = vunpack.c.l.b16 %v288
        %v328 = vunpack.c.l.b16 %v289
        %v329 = vunpack.c.l.b16 %v290
        %v330 = vpack.c.b16 %v315, %v314
        %v331 = vpack.c.b16 %v317, %v316
        %v332 = vpack.c.b16 %v319, %v318
        %v333 = vpack.c.b16 %v321, %v320
        %v334 = vpack.c.b16 %v323, %v322
        %v335 = vpack.c.b16 %v325, %v324
        %v336 = vpack.c.b16 %v327, %v326
        %v337 = vpack.c.b16 %v329, %v328
        %346 = vmatprep.subr.bf16.mxu0 0
        %347 = vmatpush1.bf16.msra.mxu0 %v330
        %348 = vmatprep.subr.bf16.mxu0 0
        %349 = vmatpush1.bf16.msra.mxu0 %v331
        %350 = vmatprep.subr.bf16.mxu0 0
        %351 = vmatpush1.bf16.msra.mxu0 %v332
        %352 = vmatprep.subr.bf16.mxu0 0
        %353 = vmatpush1.bf16.msra.mxu0 %v333
        %354 = vmatprep.subr.bf16.mxu0 0
        %355 = vmatpush1.bf16.msra.mxu0 %v334
        %356 = vmatprep.subr.bf16.mxu0 0
        %357 = vmatpush1.bf16.msra.mxu0 %v335
        %358 = vmatprep.subr.bf16.mxu0 0
        %359 = vmatpush1.bf16.msra.mxu0 %v336
        %360 = vmatprep.subr.bf16.mxu0 0
        %361 = vmatpush1.bf16.msra.mxu0 %v337
        %362 = vmatprep.subr.bf16.mxu0 0
        %363 = vmatpush1.bf16.msra.mxu0 0
        %364 = vmatprep.subr.bf16.mxu0 0
        %365 = vmatpush1.bf16.msra.mxu0 0
        %366 = vmatprep.subr.bf16.mxu0 0
        %367 = vmatpush1.bf16.msra.mxu0 0
        %368 = vmatprep.subr.bf16.mxu0 0
        %369 = vmatpush1.bf16.msra.mxu0 0
        %370 = vmatprep.subr.bf16.mxu0 0
        %371 = vmatpush1.bf16.msra.mxu0 0
        %372 = vmatprep.subr.bf16.mxu0 0
        %373 = vmatpush1.bf16.msra.mxu0 0
        %374 = vmatprep.subr.bf16.mxu0 0
        %375 = vmatpush1.bf16.msra.mxu0 0
        %376 = vmatprep.subr.bf16.mxu0 0
        %377 = vmatpush1.bf16.msra.mxu0 0
        %378 = vmatprep.mubr.bf16.mxu0 0
        %379 = vmatmul.mubr.bf16.gmra.mrb[0].mxu0 %v274
        %v380 = vpop.f32.mrb[0].mxu0
        %v381 = vadd.f32 %v296, %v380
        %v382 = vpop.f32.mrb[0].mxu0
        %v383 = vpop.f32.mrb[0].mxu0
        %v384 = vpop.f32.mrb[0].mxu0
        %385 = vdwg.mxu0
        %v386 = vpack.c.bf16 %v381, %v381
        %387 = vst [vmem:[%s258] sm:$0xf] %v386
        %s388 = smul.u32 %s27, 8
        %v389 = vlaneseq
        %v390 = vshrl.u32 %v389, 7
        %v391 = vstv %s388
        %v392 = vadd.s32 %v391, %v390
        %vm393 = vcmp.lt.s32.totalorder %v392, 20
        %v394 = vsel %vm393, 1, 0
        %vm395 = vcmp.eq.s32.totalorder %v394, 1
        %v396 = vsel %vm395, %v381, 0.0
        %v397 = vadd.f32 %v396, 0.0
        %398 = vst [vmem:[%s265] sm:$0xff] %v397
        %v399 = vmul.f32 %v396, %v396
        %v400 = vadd.f32 %v399, 0.0
        %401 = vst [vmem:[%s272] sm:$0xff] %v400
        %s402 = sand.u32 %s103, 1
        %s403 = scalar_lea.sflag [#allocation4], %s402
        %s404 = sand.u32 %s103, 1
        %s405 = smul.addr %s404, 4
        %s406 = scalar_lea.vmem [#allocation7], %s405
        %s407 = sand.u32 %s27, 1
        %s408 = scalar_lea.sflag [#allocation9], %s407
        %s409 = sand.u32 %s129, 1
        %s410 = smul.addr %s409, 8
        %s411 = scalar_lea.vmem [#allocation8], %s410
        %s412 = sand.u32 %s27, 1
        %s413 = scalar_lea.sflag [#allocation9], %s412
        %s414 = sand.u32 %s155, 1
        %s415 = smul.addr %s414, 8
        %s416 = scalar_lea.vmem [#allocation10], %s415
        // Predicated region
        $region41: #{tpu_custom_call.1} parent=31 // pred_check
          %p417 = pneg %p113
        $region42: #{tpu_custom_call.1} parent=31 // pred_check_branch
          %419 = sbr.rel (%p417) target = $region44
        $region43: #{tpu_custom_call.1} parent=31 // pred_region
          %s421 = ssub.s32 64, 64
          %422 = vsyncadd %s403, %s421
          %s423 = smul.addr %s27, 64
          %s424 = scalar_lea.hbm %s3, %s423
          %s426 = sshll.u32 %s406, 4
          %s427 = int_to_ptr.vmem [resolvable:$true] %s426
          %429 = dma.vmem_to_hbm [thread:$0]  %s427, 64, %s424, %s403
        $region44: #{tpu_custom_call.1} parent=31 // pred_fallthru
          _
        // Predicated region
        $region45: #{tpu_custom_call.1} parent=31 // pred_check
          %p430 = pneg %p139
        $region46: #{tpu_custom_call.1} parent=31 // pred_check_branch
          %432 = sbr.rel (%p430) target = $region48
        $region47: #{tpu_custom_call.1} parent=31 // pred_region
          %s434 = ssub.s32 128, 128
          %435 = vsyncadd %s408, %s434
          %s436 = smul.addr %s27, 128
          %s437 = scalar_lea.hbm %s4, %s436
          %s439 = sshll.u32 %s411, 4
          %s440 = int_to_ptr.vmem [resolvable:$true] %s439
          %442 = dma.vmem_to_hbm [thread:$0]  %s440, 128, %s437, %s408
        $region48: #{tpu_custom_call.1} parent=31 // pred_fallthru
          _
        // Predicated region
        $region49: #{tpu_custom_call.1} parent=31 // pred_check
          %p443 = pneg %p165
        $region50: #{tpu_custom_call.1} parent=31 // pred_check_branch
          %445 = sbr.rel (%p443) target = $region52
        $region51: #{tpu_custom_call.1} parent=31 // pred_region
          %s447 = ssub.s32 128, 128
          %448 = vsyncadd %s413, %s447
          %s449 = smul.addr %s27, 128
          %s450 = scalar_lea.hbm %s5, %s449
          %s452 = sshll.u32 %s416, 4
          %s453 = int_to_ptr.vmem [resolvable:$true] %s452
          %455 = dma.vmem_to_hbm [thread:$0]  %s453, 128, %s450, %s413
        $region52: #{tpu_custom_call.1} parent=31 // pred_fallthru
          _
      $region32: #{tpu_custom_call.1} parent=5 // pred_fallthru
        _
      %p456 = scmp.le.s32.totalorder 2, %s22
      // Predicated region
      $region53: #{tpu_custom_call.1} parent=5 // pred_check
        %p457 = pneg %p456
      $region54: #{tpu_custom_call.1} parent=5 // pred_check_branch
        %459 = sbr.rel (%p457) target = $region56
      $region55: #{tpu_custom_call.1} parent=5 // pred_region
        %s460 = ssub.s32 %s22, 2
        // Predicated region
        $region57: #{tpu_custom_call.1} parent=55 // pred_check
          %p461 = pneg %p119
        $region58: #{tpu_custom_call.1} parent=55 // pred_check_branch
          %463 = sbr.rel (%p461) target = $region60
        $region59: #{tpu_custom_call.1} parent=55 // pred_region
          %s464 = sand.u32 %s104, 1
          %s465 = scalar_lea.sflag [#allocation4], %s464
          %s466 = sand.u32 %s104, 1
          %s467 = smul.addr %s466, 4
          %s468 = scalar_lea.vmem [#allocation7], %s467
          %469 = dma.done %s465, 64
        $region60: #{tpu_custom_call.1} parent=55 // pred_fallthru
          _
        // Predicated region
        $region61: #{tpu_custom_call.1} parent=55 // pred_check
          %p470 = pneg %p145
        $region62: #{tpu_custom_call.1} parent=55 // pred_check_branch
          %472 = sbr.rel (%p470) target = $region64
        $region63: #{tpu_custom_call.1} parent=55 // pred_region
          %s473 = sand.u32 %s28, 1
          %s474 = scalar_lea.sflag [#allocation9], %s473
          %s475 = sand.u32 %s130, 1
          %s476 = smul.addr %s475, 8
          %s477 = scalar_lea.vmem [#allocation8], %s476
          %478 = dma.done %s474, 128
        $region64: #{tpu_custom_call.1} parent=55 // pred_fallthru
          _
        // Predicated region
        $region65: #{tpu_custom_call.1} parent=55 // pred_check
          %p479 = pneg %p171
        $region66: #{tpu_custom_call.1} parent=55 // pred_check_branch
          %481 = sbr.rel (%p479) target = $region68
        $region67: #{tpu_custom_call.1} parent=55 // pred_region
          %s482 = sand.u32 %s28, 1
          %s483 = scalar_lea.sflag [#allocation9], %s482
          %s484 = sand.u32 %s156, 1
          %s485 = smul.addr %s484, 8
          %s486 = scalar_lea.vmem [#allocation10], %s485
          %487 = dma.done %s483, 128
        $region68: #{tpu_custom_call.1} parent=55 // pred_fallthru
          _
      $region56: #{tpu_custom_call.1} parent=5 // pred_fallthru
        _
    $region6: #{tpu_custom_call.1} parent=1 // loop_footer
      %s26 = sadd.s32 1, %s22
    $region7: #{tpu_custom_call.1} parent=1 // loop_footer_branch
      %21 = sbr.rel target = $region3
    $region8: #{tpu_custom_call.1} parent=1 // loop_exit
      _
    %488 = vsyncpa [#allocation3], 1
    %s489 = scalar_lea.sflag [#allocation3], 1
    %490 = vsyncpa %s489, 1
    %491 = vsyncpa [#allocation6], 1
    %492 = vsyncpa [#allocation4], 1
    %s493 = scalar_lea.sflag [#allocation4], 1
    %494 = vsyncpa %s493, 1
    %495 = vsyncpa [#allocation9], 1
    %s496 = scalar_lea.sflag [#allocation9], 1
    %497 = vsyncpa %s496, 1

</llo_original>
